<compile_context>
chip_gen: v5e
topology: v5e:2x2
jax: 0.10.0
libtpu: 0.0.40
codegen_flags: <defaults>
</compile_context>

<pallas_src>
import jax
import jax.numpy as jnp
from jax.experimental import pallas as pl
from jax.experimental.pallas import tpu as pltpu

NUM_FEATURES = 63   # encoder width demanded by NetD's head slicing
F_PAD = 128         # lane-dense padded feature width


def _sigmoid(z):
    # Stable sigmoid via tanh (EUP path); no exp(-z) overflow for z << 0.
    return 0.5 * (jnp.tanh(0.5 * z) + 1.0)


def netd_kernel(x_ref, w_ref, b_ref, f_ref, h_ref):
    # x: (TB, K) bf16 | w: (K, 128) bf16 | b: (1, 128) f32
    x = x_ref[...]
    w = w_ref[...]
    b = b_ref[...]

    # encoder: full-spatial conv == dense projection on the MXU, f32 accumulate
    f = jnp.dot(x, w, preferred_element_type=jnp.float32) + b   # (TB, 128) f32
    f_ref[...] = f                                               # raw f_enc slab

    tb, fp = f.shape
    lane = jax.lax.broadcasted_iota(jnp.int32, (tb, fp), 1)

    # Three 20-wide log-softmaxes (lanes 1..20, 21..40, 41..60) computed with
    # masked reductions over the full lane-dense tile (no sub-128-lane slices).
    head = jnp.zeros_like(f)
    for s in range(3):
        lo = 1 + 20 * s
        m = (lane >= lo) & (lane < lo + 20)
        fm = jnp.where(m, f, -jnp.inf)
        mx = jnp.max(fm, axis=-1, keepdims=True)              # per-segment max
        e = jnp.where(m, jnp.exp(f - mx), 0.0)
        denom = jnp.sum(e, axis=-1, keepdims=True)
        head = jnp.where(m, f - mx - jnp.log(denom), head)

    head = jnp.where(lane == 0, _sigmoid(f), head)            # Q  = sigmoid
    head = jnp.where(lane == 61, jnp.exp(0.5 * f), head)      # C_std = sqrt(exp(f))
    head = jnp.where(lane == 62, f, head)                     # mu
    h_ref[...] = head                                          # fused-head slab


def netd_forward(x_nchw, w, b, *, tb=None):
    """x_nchw: (B,C,H,W); w: (C*H*W, 63); b: (63,). Returns the NetD 7-tuple."""
    B = x_nchw.shape[0]
    K, F = w.shape
    assert F == NUM_FEATURES

    if tb is None:
        tb = min(256, max(8, pl.cdiv(B, 8) * 8))   # batch tile, multiple of 8
    b_pad = pl.cdiv(B, tb) * tb

    # bf16 MXU operands, zero-padded batch rows and feature lanes.
    x_flat = x_nchw.reshape(B, K).astype(jnp.bfloat16)
    x_p = jnp.zeros((b_pad, K), jnp.bfloat16).at[:B].set(x_flat)
    w_p = jnp.zeros((K, F_PAD), jnp.bfloat16).at[:, :F].set(w.astype(jnp.bfloat16))
    b_p = jnp.zeros((1, F_PAD), jnp.float32).at[0, :F].set(b.astype(jnp.float32))

    out_shapes = (
        jax.ShapeDtypeStruct((b_pad, F_PAD), jnp.float32),   # raw encoder slab
        jax.ShapeDtypeStruct((b_pad, F_PAD), jnp.float32),   # fused-head slab
    )
    cost = pl.CostEstimate(
        flops=2 * b_pad * K * F_PAD,
        transcendentals=b_pad * (3 * 20 + 4),
        bytes_accessed=(x_p.size * 2 + w_p.size * 2 + b_p.size * 4
                        + 2 * b_pad * F_PAD * 4),
    )

    f_slab, h_slab = pl.pallas_call(
        netd_kernel,
        grid=(b_pad // tb,),
        out_shape=out_shapes,
        in_specs=[
            pl.BlockSpec((tb, K), lambda i: (i, 0)),       # x: batch-tiled
            pl.BlockSpec((K, F_PAD), lambda i: (0, 0)),    # w: resident across grid
            pl.BlockSpec((1, F_PAD), lambda i: (0, 0)),    # b: resident across grid
        ],
        out_specs=(
            pl.BlockSpec((tb, F_PAD), lambda i: (i, 0)),
            pl.BlockSpec((tb, F_PAD), lambda i: (i, 0)),
        ),
        compiler_params=pltpu.CompilerParams(
            dimension_semantics=("parallel",),
            vmem_limit_bytes=32 * 1024 * 1024,
        ),
        cost_estimate=cost,
    )(x_p, w_p, b_p)

    # Slice heads in the wrapper (lane-dense stores inside the kernel).
    f_enc = f_slab[:B, :NUM_FEATURES]
    q     = h_slab[:B, 0]
    d1    = h_slab[:B, 1:21]
    d2    = h_slab[:B, 21:41]
    d3    = h_slab[:B, 41:61]
    c_std = h_slab[:B, 61]
    mu    = h_slab[:B, 62]
    # Match PyTorch return order: (f_enc_X, q, d1, d2, d3, mu, c_std)
    return f_enc, q, d1, d2, d3, mu, c_std


def _reference(x_nchw, w, b):
    """Pure-JAX reference mirroring the PyTorch forward (same bf16 MXU operands)."""
    B = x_nchw.shape[0]
    xb = x_nchw.reshape(B, -1).astype(jnp.bfloat16).astype(jnp.float32)
    wb = w.astype(jnp.bfloat16).astype(jnp.float32)
    f = xb @ wb + b.astype(jnp.float32)
    q = jax.nn.sigmoid(f[:, 0])
    d1 = jax.nn.log_softmax(f[:, 1:21], axis=1)
    d2 = jax.nn.log_softmax(f[:, 21:41], axis=1)
    d3 = jax.nn.log_softmax(f[:, 41:61], axis=1)
    c_std = jnp.sqrt(jnp.exp(f[:, 61]))
    mu = f[:, 62]
    return f, q, d1, d2, d3, mu, c_std


if __name__ == "__main__":
    key = jax.random.PRNGKey(0)
    kx, kw, kb = jax.random.split(key, 3)

    B, C, H, W = 2, 4, 16, 16
    K = C * H * W

    x = jax.random.normal(kx, (B, C, H, W), dtype=jnp.float32)
    # deterministic synthetic encoder parameters (full-spatial conv weights)
    w = jax.random.normal(kw, (K, NUM_FEATURES), dtype=jnp.float32) * 0.02
    b = jax.random.normal(kb, (NUM_FEATURES,), dtype=jnp.float32) * 0.02

    outs = jax.block_until_ready(netd_forward(x, w, b))
    refs = jax.block_until_ready(_reference(x, w, b))

    names = ("f_enc_X", "q", "d1", "d2", "d3", "mu", "c_std")
    for name, o, r in zip(names, outs, refs):
        assert o.shape == r.shape, (name, o.shape, r.shape)
        assert jnp.max(jnp.abs(o - r)) < 1e-4, (name, float(jnp.max(jnp.abs(o - r))))

    print("KERNEL_OK")
</pallas_src>

<mosaic_0001>
module attributes {stable_mosaic.version = 11 : i64} {
  func.func @netd_kernel(%arg0: i32, %arg1: memref<8x1024xbf16, #tpu.memory_space<vmem>>, %arg2: memref<1024x128xbf16, #tpu.memory_space<vmem>>, %arg3: memref<1x128xf32, #tpu.memory_space<vmem>>, %arg4: memref<8x128xf32, #tpu.memory_space<vmem>>, %arg5: memref<8x128xf32, #tpu.memory_space<vmem>>) attributes {dimension_semantics = [#tpu.dimension_semantics<parallel>], iteration_bounds = array<i64: 1>, scalar_prefetch = 0 : i64, scratch_operands = 0 : i64, tpu.core_type = #tpu.core_type<tc>, window_params = [{transform_indices = @transform_0, window_bounds = array<i64: 8, 1024>}, {pipeline_mode = #tpu.pipeline_mode<synchronous>, transform_indices = @transform_1, window_bounds = array<i64: 1024, 128>}, {pipeline_mode = #tpu.pipeline_mode<synchronous>, transform_indices = @transform_2, window_bounds = array<i64: 1, 128>}, {transform_indices = @transform_3, window_bounds = array<i64: 8, 128>}, {transform_indices = @transform_4, window_bounds = array<i64: 8, 128>}]} {
    %c0 = arith.constant 0 : index
    %c0_0 = arith.constant 0 : index
    %0 = vector.load %arg1[%c0, %c0_0] : memref<8x1024xbf16, #tpu.memory_space<vmem>>, vector<8x1024xbf16>
    %c0_1 = arith.constant 0 : index
    %c0_2 = arith.constant 0 : index
    %1 = vector.load %arg2[%c0_1, %c0_2] : memref<1024x128xbf16, #tpu.memory_space<vmem>>, vector<1024x128xbf16>
    %c0_3 = arith.constant 0 : index
    %c0_4 = arith.constant 0 : index
    %2 = vector.load %arg3[%c0_3, %c0_4] : memref<1x128xf32, #tpu.memory_space<vmem>>, vector<1x128xf32>
    %cst = arith.constant dense<0.000000e+00> : vector<8x128xf32>
    %3 = tpu.matmul %0, %1, %cst {dimension_numbers = #tpu.dot_dimension_numbers<[1], [0], [0], [1], [0, 0, 1, 1], [], []>} : vector<8x1024xbf16>, vector<1024x128xbf16>, vector<8x128xf32> -> vector<8x128xf32>
    %4 = vector.broadcast %2 : vector<1x128xf32> to vector<8x128xf32>
    %5 = arith.addf %3, %4 : vector<8x128xf32>
    %c0_5 = arith.constant 0 : index
    %c0_6 = arith.constant 0 : index
    %6 = vector.load %arg4[%c0_5, %c0_6] : memref<8x128xf32, #tpu.memory_space<vmem>>, vector<8x128xf32>
    tpu.vector_store %arg4[%c0_5, %c0_6], %5 {strides = array<i32>} : memref<8x128xf32, #tpu.memory_space<vmem>>, vector<8x128xf32>,
    %7 = tpu.iota {dimensions = array<i32: 1>} : vector<8x128xi32>
    %cst_7 = arith.constant 0.000000e+00 : f32
    %8 = vector.broadcast %cst_7 : f32 to vector<8x128xf32>
    %c1_i32 = arith.constant 1 : i32
    %9 = vector.broadcast %c1_i32 : i32 to vector<8x128xi32>
    %10 = arith.cmpi sge, %7, %9 : vector<8x128xi32>
    %c21_i32 = arith.constant 21 : i32
    %11 = vector.broadcast %c21_i32 : i32 to vector<8x128xi32>
    %12 = arith.cmpi slt, %7, %11 : vector<8x128xi32>
    %13 = arith.andi %10, %12 : vector<8x128xi1>
    %cst_8 = arith.constant 0xFF800000 : f32
    %14 = vector.broadcast %cst_8 : f32 to vector<8x128xf32>
    %15 = arith.select %13, %5, %14 : vector<8x128xi1>, vector<8x128xf32>
    %cst_9 = arith.constant dense<0xFF800000> : vector<8xf32>
    %16 = vector.multi_reduction <maximumf>, %15, %cst_9 [1] : vector<8x128xf32> to vector<8xf32>
    %17 = vector.shape_cast %16 : vector<8xf32> to vector<8x1xf32>
    %18 = vector.broadcast %17 : vector<8x1xf32> to vector<8x128xf32>
    %19 = arith.subf %5, %18 : vector<8x128xf32>
    %20 = math.exp %19 : vector<8x128xf32>
    %cst_10 = arith.constant 0.000000e+00 : f32
    %21 = vector.broadcast %cst_10 : f32 to vector<8x128xf32>
    %22 = arith.select %13, %20, %21 : vector<8x128xi1>, vector<8x128xf32>
    %cst_11 = arith.constant dense<0.000000e+00> : vector<8xf32>
    %23 = vector.multi_reduction <add>, %22, %cst_11 [1] : vector<8x128xf32> to vector<8xf32>
    %24 = vector.shape_cast %23 : vector<8xf32> to vector<8x1xf32>
    %25 = vector.broadcast %17 : vector<8x1xf32> to vector<8x128xf32>
    %26 = arith.subf %5, %25 : vector<8x128xf32>
    %27 = math.log %24 : vector<8x1xf32>
    %28 = vector.broadcast %27 : vector<8x1xf32> to vector<8x128xf32>
    %29 = arith.subf %26, %28 : vector<8x128xf32>
    %30 = arith.select %13, %29, %8 : vector<8x128xi1>, vector<8x128xf32>
    %c21_i32_12 = arith.constant 21 : i32
    %31 = vector.broadcast %c21_i32_12 : i32 to vector<8x128xi32>
    %32 = arith.cmpi sge, %7, %31 : vector<8x128xi32>
    %c41_i32 = arith.constant 41 : i32
    %33 = vector.broadcast %c41_i32 : i32 to vector<8x128xi32>
    %34 = arith.cmpi slt, %7, %33 : vector<8x128xi32>
    %35 = arith.andi %32, %34 : vector<8x128xi1>
    %cst_13 = arith.constant 0xFF800000 : f32
    %36 = vector.broadcast %cst_13 : f32 to vector<8x128xf32>
    %37 = arith.select %35, %5, %36 : vector<8x128xi1>, vector<8x128xf32>
    %cst_14 = arith.constant dense<0xFF800000> : vector<8xf32>
    %38 = vector.multi_reduction <maximumf>, %37, %cst_14 [1] : vector<8x128xf32> to vector<8xf32>
    %39 = vector.shape_cast %38 : vector<8xf32> to vector<8x1xf32>
    %40 = vector.broadcast %39 : vector<8x1xf32> to vector<8x128xf32>
    %41 = arith.subf %5, %40 : vector<8x128xf32>
    %42 = math.exp %41 : vector<8x128xf32>
    %cst_15 = arith.constant 0.000000e+00 : f32
    %43 = vector.broadcast %cst_15 : f32 to vector<8x128xf32>
    %44 = arith.select %35, %42, %43 : vector<8x128xi1>, vector<8x128xf32>
    %cst_16 = arith.constant dense<0.000000e+00> : vector<8xf32>
    %45 = vector.multi_reduction <add>, %44, %cst_16 [1] : vector<8x128xf32> to vector<8xf32>
    %46 = vector.shape_cast %45 : vector<8xf32> to vector<8x1xf32>
    %47 = vector.broadcast %39 : vector<8x1xf32> to vector<8x128xf32>
    %48 = arith.subf %5, %47 : vector<8x128xf32>
    %49 = math.log %46 : vector<8x1xf32>
    %50 = vector.broadcast %49 : vector<8x1xf32> to vector<8x128xf32>
    %51 = arith.subf %48, %50 : vector<8x128xf32>
    %52 = arith.select %35, %51, %30 : vector<8x128xi1>, vector<8x128xf32>
    %c41_i32_17 = arith.constant 41 : i32
    %53 = vector.broadcast %c41_i32_17 : i32 to vector<8x128xi32>
    %54 = arith.cmpi sge, %7, %53 : vector<8x128xi32>
    %c61_i32 = arith.constant 61 : i32
    %55 = vector.broadcast %c61_i32 : i32 to vector<8x128xi32>
    %56 = arith.cmpi slt, %7, %55 : vector<8x128xi32>
    %57 = arith.andi %54, %56 : vector<8x128xi1>
    %cst_18 = arith.constant 0xFF800000 : f32
    %58 = vector.broadcast %cst_18 : f32 to vector<8x128xf32>
    %59 = arith.select %57, %5, %58 : vector<8x128xi1>, vector<8x128xf32>
    %cst_19 = arith.constant dense<0xFF800000> : vector<8xf32>
    %60 = vector.multi_reduction <maximumf>, %59, %cst_19 [1] : vector<8x128xf32> to vector<8xf32>
    %61 = vector.shape_cast %60 : vector<8xf32> to vector<8x1xf32>
    %62 = vector.broadcast %61 : vector<8x1xf32> to vector<8x128xf32>
    %63 = arith.subf %5, %62 : vector<8x128xf32>
    %64 = math.exp %63 : vector<8x128xf32>
    %cst_20 = arith.constant 0.000000e+00 : f32
    %65 = vector.broadcast %cst_20 : f32 to vector<8x128xf32>
    %66 = arith.select %57, %64, %65 : vector<8x128xi1>, vector<8x128xf32>
    %cst_21 = arith.constant dense<0.000000e+00> : vector<8xf32>
    %67 = vector.multi_reduction <add>, %66, %cst_21 [1] : vector<8x128xf32> to vector<8xf32>
    %68 = vector.shape_cast %67 : vector<8xf32> to vector<8x1xf32>
    %69 = vector.broadcast %61 : vector<8x1xf32> to vector<8x128xf32>
    %70 = arith.subf %5, %69 : vector<8x128xf32>
    %71 = math.log %68 : vector<8x1xf32>
    %72 = vector.broadcast %71 : vector<8x1xf32> to vector<8x128xf32>
    %73 = arith.subf %70, %72 : vector<8x128xf32>
    %74 = arith.select %57, %73, %52 : vector<8x128xi1>, vector<8x128xf32>
    %c0_i32 = arith.constant 0 : i32
    %75 = vector.broadcast %c0_i32 : i32 to vector<8x128xi32>
    %76 = arith.cmpi eq, %7, %75 : vector<8x128xi32>
    %cst_22 = arith.constant 5.000000e-01 : f32
    %77 = vector.broadcast %cst_22 : f32 to vector<8x128xf32>
    %78 = arith.mulf %77, %5 : vector<8x128xf32>
    %79 = math.tanh %78 : vector<8x128xf32>
    %cst_23 = arith.constant 1.000000e+00 : f32
    %80 = vector.broadcast %cst_23 : f32 to vector<8x128xf32>
    %81 = arith.addf %79, %80 : vector<8x128xf32>
    %cst_24 = arith.constant 5.000000e-01 : f32
    %82 = vector.broadcast %cst_24 : f32 to vector<8x128xf32>
    %83 = arith.mulf %82, %81 : vector<8x128xf32>
    %84 = arith.select %76, %83, %74 : vector<8x128xi1>, vector<8x128xf32>
    %c61_i32_25 = arith.constant 61 : i32
    %85 = vector.broadcast %c61_i32_25 : i32 to vector<8x128xi32>
    %86 = arith.cmpi eq, %7, %85 : vector<8x128xi32>
    %cst_26 = arith.constant 5.000000e-01 : f32
    %87 = vector.broadcast %cst_26 : f32 to vector<8x128xf32>
    %88 = arith.mulf %87, %5 : vector<8x128xf32>
    %89 = math.exp %88 : vector<8x128xf32>
    %90 = arith.select %86, %89, %84 : vector<8x128xi1>, vector<8x128xf32>
    %c62_i32 = arith.constant 62 : i32
    %91 = vector.broadcast %c62_i32 : i32 to vector<8x128xi32>
    %92 = arith.cmpi eq, %7, %91 : vector<8x128xi32>
    %93 = arith.select %92, %5, %90 : vector<8x128xi1>, vector<8x128xf32>
    %c0_27 = arith.constant 0 : index
    %c0_28 = arith.constant 0 : index
    %94 = vector.load %arg5[%c0_27, %c0_28] : memref<8x128xf32, #tpu.memory_space<vmem>>, vector<8x128xf32>
    tpu.vector_store %arg5[%c0_27, %c0_28], %93 {strides = array<i32>} : memref<8x128xf32, #tpu.memory_space<vmem>>, vector<8x128xf32>,
    return
  }
  func.func @transform_0(%arg0: i32) -> (i32, i32) {
    %c0_i32 = arith.constant 0 : i32
    %c0_i32_0 = arith.constant 0 : i32
    return %arg0, %c0_i32 : i32, i32
  }
  func.func @transform_1(%arg0: i32) -> (i32, i32) {
    %c0_i32 = arith.constant 0 : i32
    %c0_i32_0 = arith.constant 0 : i32
    %c0_i32_1 = arith.constant 0 : i32
    return %c0_i32, %c0_i32_0 : i32, i32
  }
  func.func @transform_2(%arg0: i32) -> (i32, i32) {
    %c0_i32 = arith.constant 0 : i32
    %c0_i32_0 = arith.constant 0 : i32
    %c0_i32_1 = arith.constant 0 : i32
    return %c0_i32, %c0_i32_0 : i32, i32
  }
  func.func @transform_3(%arg0: i32) -> (i32, i32) {
    %c0_i32 = arith.constant 0 : i32
    %c0_i32_0 = arith.constant 0 : i32
    return %arg0, %c0_i32 : i32, i32
  }
  func.func @transform_4(%arg0: i32) -> (i32, i32) {
    %c0_i32 = arith.constant 0 : i32
    %c0_i32_0 = arith.constant 0 : i32
    return %arg0, %c0_i32 : i32, i32
  }
}

</mosaic_0001>

<llo_original>
// kernel: tpu_custom_call.1
$region0: #{tpu_custom_call.1}
  #allocation0 [shape = 'u32[]', space=smem, size = 0x4, offset = 0x4, fixed_abs, tag = 'smem constant byte address 0x4 - core index']
  #allocation1 [shape = 'u32[72,128]{1,0:T(1,128)}', space=vmem, size = 0x9000, scoped, tag = 'internal scratch']
  %s0 = inlined_call_operand.hbm [shape: bf16[8,1024], index: 0, kind: input, shape index: {}]
  %s1 = inlined_call_operand.hbm [shape: bf16[1024,128], index: 1, kind: input, shape index: {}]
  %s2 = inlined_call_operand.vmem [shape: f32[1,128], index: 2, kind: input, shape index: {}]
  %s3 = inlined_call_operand.hbm [shape: f32[8,128], index: 3, kind: output, shape index: {0}]
  %s4 = inlined_call_operand.hbm [shape: f32[8,128], index: 4, kind: output, shape index: {1}]
  %5 = xla_tuple %s3, %s4
  %s6 = sld [smem:[#allocation0]]
  $region38: #{tpu_custom_call.1} parent=0
    _
  %s8 = ssub.s32 1, %s6
  %s9 = scalar_select 0, %s8, %s6
  $region1: #{tpu_custom_call.1} parent=0
    #allocation2 [shape = 'u8[16384]{0}', space=vmem, size = 0x4000, scoped, tag = 'input window, operand 0, single buffered']
    #allocation3 [shape = 's32[1]{0}', space=sflag, size = 0x4, scoped, tag = 'scoped memory for tpu_custom_call.1']
    #allocation4 [shape = 's32[1]{0}', space=sflag, size = 0x4, scoped, tag = 'scoped memory for tpu_custom_call.1']
    #allocation5 [shape = 'u8[262144]{0}', space=vmem, size = 0x40000, scoped, tag = 'input window, operand 1, single buffered']
    #allocation6 [shape = 's32[1]{0}', space=sflag, size = 0x4, scoped, tag = 'scoped memory for tpu_custom_call.1']
    #allocation7 [shape = 'u8[4096]{0}', space=vmem, size = 0x1000, scoped, tag = 'output window, operand 0, single buffered']
    #allocation8 [shape = 'u8[4096]{0}', space=vmem, size = 0x1000, scoped, tag = 'output window, operand 1, single buffered']
    #allocation9 [shape = 's32[1]{0}', space=sflag, size = 0x4, scoped, tag = 'scoped memory for tpu_custom_call.1']
    %10 = vsyncpa [#allocation3], 0
    %11 = vsyncpa [#allocation6], 0
    %12 = vsyncpa [#allocation4], 0
    %13 = vsyncpa [#allocation9], 0
    // Predicated region
    $region2: #{tpu_custom_call.1} parent=1 // pred_check
      _
    $region3: #{tpu_custom_call.1} parent=1 // pred_check_branch
      %15 = sbr.rel (0) target = $region5
    $region4: #{tpu_custom_call.1} parent=1 // pred_region
      %17 = vsyncadd [#allocation3], 0
      %s19 = sshll.u32 %s0, 4
      %s20 = int_to_ptr.hbm [resolvable:$true] %s19
      %s21 = sshll.u32 [#allocation2], 4
      %s22 = int_to_ptr.vmem [resolvable:$true] %s21
      %24 = dma.hbm_to_vmem [thread:$0]  %s20, 512, %s22, [#allocation3]
    $region5: #{tpu_custom_call.1} parent=1 // pred_fallthru
      _
    // Predicated region
    $region6: #{tpu_custom_call.1} parent=1 // pred_check
      _
    $region7: #{tpu_custom_call.1} parent=1 // pred_check_branch
      %26 = sbr.rel (0) target = $region9
    $region8: #{tpu_custom_call.1} parent=1 // pred_region
      %28 = vsyncadd [#allocation6], 0
      %s29 = sshll.u32 %s1, 4
      %s30 = int_to_ptr.hbm [resolvable:$true] %s29
      %s31 = sshll.u32 [#allocation5], 4
      %s32 = int_to_ptr.vmem [resolvable:$true] %s31
      %37 = dma.hbm_to_vmem [thread:$0]  %s30, 8192, %s32, [#allocation6], 64, 64, 4
    $region9: #{tpu_custom_call.1} parent=1 // pred_fallthru
      _
    // Predicated region
    $region10: #{tpu_custom_call.1} parent=1 // pred_check
      _
    $region11: #{tpu_custom_call.1} parent=1 // pred_check_branch
      %39 = sbr.rel (0) target = $region13
    $region12: #{tpu_custom_call.1} parent=1 // pred_region
      _
    $region13: #{tpu_custom_call.1} parent=1 // pred_fallthru
      _
    // Predicated region
    $region14: #{tpu_custom_call.1} parent=1 // pred_check
      _
    $region15: #{tpu_custom_call.1} parent=1 // pred_check_branch
      %41 = sbr.rel (0) target = $region17
    $region16: #{tpu_custom_call.1} parent=1 // pred_region
      %43 = dma.done [#allocation3], 512
    $region17: #{tpu_custom_call.1} parent=1 // pred_fallthru
      _
    // Predicated region
    $region18: #{tpu_custom_call.1} parent=1 // pred_check
      _
    $region19: #{tpu_custom_call.1} parent=1 // pred_check_branch
      %45 = sbr.rel (0) target = $region21
    $region20: #{tpu_custom_call.1} parent=1 // pred_region
      %47 = dma.done [#allocation6], 8192
    $region21: #{tpu_custom_call.1} parent=1 // pred_fallthru
      _
    %v48 = vld [vmem:[#allocation2] sm:$0xff]
    %v49 = vld [vmem:[#allocation2 + $0x8] sm:$0xff]
    %v50 = vld [vmem:[#allocation2 + $0x10] sm:$0xff]
    %v51 = vld [vmem:[#allocation2 + $0x18] sm:$0xff]
    %v52 = vld [vmem:[#allocation5] sm:$0xf]
    %v53 = vld [vmem:[#allocation5 + $0x4] sm:$0xf]
    %v54 = vld [vmem:[#allocation5 + $0x8] sm:$0xf]
    %v55 = vld [vmem:[#allocation5 + $0xc] sm:$0xf]
    %v56 = vld [vmem:[#allocation5 + $0x10] sm:$0xf]
    %v57 = vld [vmem:[#allocation5 + $0x14] sm:$0xf]
    %v58 = vld [vmem:[#allocation5 + $0x18] sm:$0xf]
    %v59 = vld [vmem:[#allocation5 + $0x1c] sm:$0xf]
    %v60 = vld [vmem:[#allocation5 + $0x20] sm:$0xf]
    %v61 = vld [vmem:[#allocation5 + $0x24] sm:$0xf]
    %v62 = vld [vmem:[#allocation5 + $0x28] sm:$0xf]
    %v63 = vld [vmem:[#allocation5 + $0x2c] sm:$0xf]
    %v64 = vld [vmem:[#allocation5 + $0x30] sm:$0xf]
    %v65 = vld [vmem:[#allocation5 + $0x34] sm:$0xf]
    %v66 = vld [vmem:[#allocation5 + $0x38] sm:$0xf]
    %v67 = vld [vmem:[#allocation5 + $0x3c] sm:$0xf]
    %v68 = vld [vmem:[#allocation5 + $0x40] sm:$0xf]
    %v69 = vld [vmem:[#allocation5 + $0x44] sm:$0xf]
    %v70 = vld [vmem:[#allocation5 + $0x48] sm:$0xf]
    %v71 = vld [vmem:[#allocation5 + $0x4c] sm:$0xf]
    %v72 = vld [vmem:[#allocation5 + $0x50] sm:$0xf]
    %v73 = vld [vmem:[#allocation5 + $0x54] sm:$0xf]
    %v74 = vld [vmem:[#allocation5 + $0x58] sm:$0xf]
    %v75 = vld [vmem:[#allocation5 + $0x5c] sm:$0xf]
    %v76 = vld [vmem:[#allocation5 + $0x60] sm:$0xf]
    %v77 = vld [vmem:[#allocation5 + $0x64] sm:$0xf]
    %v78 = vld [vmem:[#allocation5 + $0x68] sm:$0xf]
    %v79 = vld [vmem:[#allocation5 + $0x6c] sm:$0xf]
    %v80 = vld [vmem:[#allocation5 + $0x70] sm:$0xf]
    %v81 = vld [vmem:[#allocation5 + $0x74] sm:$0xf]
    %v82 = vld [vmem:[#allocation5 + $0x78] sm:$0xf]
    %v83 = vld [vmem:[#allocation5 + $0x7c] sm:$0xf]
    %v84 = vld [vmem:[#allocation5 + $0x80] sm:$0xf]
    %v85 = vld [vmem:[#allocation5 + $0x84] sm:$0xf]
    %v86 = vld [vmem:[#allocation5 + $0x88] sm:$0xf]
    %v87 = vld [vmem:[#allocation5 + $0x8c] sm:$0xf]
    %v88 = vld [vmem:[#allocation5 + $0x90] sm:$0xf]
    %v89 = vld [vmem:[#allocation5 + $0x94] sm:$0xf]
    %v90 = vld [vmem:[#allocation5 + $0x98] sm:$0xf]
    %v91 = vld [vmem:[#allocation5 + $0x9c] sm:$0xf]
    %v92 = vld [vmem:[#allocation5 + $0xa0] sm:$0xf]
    %v93 = vld [vmem:[#allocation5 + $0xa4] sm:$0xf]
    %v94 = vld [vmem:[#allocation5 + $0xa8] sm:$0xf]
    %v95 = vld [vmem:[#allocation5 + $0xac] sm:$0xf]
    %v96 = vld [vmem:[#allocation5 + $0xb0] sm:$0xf]
    %v97 = vld [vmem:[#allocation5 + $0xb4] sm:$0xf]
    %v98 = vld [vmem:[#allocation5 + $0xb8] sm:$0xf]
    %v99 = vld [vmem:[#allocation5 + $0xbc] sm:$0xf]
    %v100 = vld [vmem:[#allocation5 + $0xc0] sm:$0xf]
    %v101 = vld [vmem:[#allocation5 + $0xc4] sm:$0xf]
    %v102 = vld [vmem:[#allocation5 + $0xc8] sm:$0xf]
    %v103 = vld [vmem:[#allocation5 + $0xcc] sm:$0xf]
    %v104 = vld [vmem:[#allocation5 + $0xd0] sm:$0xf]
    %v105 = vld [vmem:[#allocation5 + $0xd4] sm:$0xf]
    %v106 = vld [vmem:[#allocation5 + $0xd8] sm:$0xf]
    %v107 = vld [vmem:[#allocation5 + $0xdc] sm:$0xf]
    %v108 = vld [vmem:[#allocation5 + $0xe0] sm:$0xf]
    %v109 = vld [vmem:[#allocation5 + $0xe4] sm:$0xf]
    %v110 = vld [vmem:[#allocation5 + $0xe8] sm:$0xf]
    %v111 = vld [vmem:[#allocation5 + $0xec] sm:$0xf]
    %v112 = vld [vmem:[#allocation5 + $0xf0] sm:$0xf]
    %v113 = vld [vmem:[#allocation5 + $0xf4] sm:$0xf]
    %v114 = vld [vmem:[#allocation5 + $0xf8] sm:$0xf]
    %v115 = vld [vmem:[#allocation5 + $0xfc] sm:$0xf]
    %v116 = vld [vmem:[#allocation5 + $0x100] sm:$0xf]
    %v117 = vld [vmem:[#allocation5 + $0x104] sm:$0xf]
    %v118 = vld [vmem:[#allocation5 + $0x108] sm:$0xf]
    %v119 = vld [vmem:[#allocation5 + $0x10c] sm:$0xf]
    %v120 = vld [vmem:[#allocation5 + $0x110] sm:$0xf]
    %v121 = vld [vmem:[#allocation5 + $0x114] sm:$0xf]
    %v122 = vld [vmem:[#allocation5 + $0x118] sm:$0xf]
    %v123 = vld [vmem:[#allocation5 + $0x11c] sm:$0xf]
    %v124 = vld [vmem:[#allocation5 + $0x120] sm:$0xf]
    %v125 = vld [vmem:[#allocation5 + $0x124] sm:$0xf]
    %v126 = vld [vmem:[#allocation5 + $0x128] sm:$0xf]
    %v127 = vld [vmem:[#allocation5 + $0x12c] sm:$0xf]
    %v128 = vld [vmem:[#allocation5 + $0x130] sm:$0xf]
    %v129 = vld [vmem:[#allocation5 + $0x134] sm:$0xf]
    %v130 = vld [vmem:[#allocation5 + $0x138] sm:$0xf]
    %v131 = vld [vmem:[#allocation5 + $0x13c] sm:$0xf]
    %v132 = vld [vmem:[#allocation5 + $0x140] sm:$0xf]
    %v133 = vld [vmem:[#allocation5 + $0x144] sm:$0xf]
    %v134 = vld [vmem:[#allocation5 + $0x148] sm:$0xf]
    %v135 = vld [vmem:[#allocation5 + $0x14c] sm:$0xf]
    %v136 = vld [vmem:[#allocation5 + $0x150] sm:$0xf]
    %v137 = vld [vmem:[#allocation5 + $0x154] sm:$0xf]
    %v138 = vld [vmem:[#allocation5 + $0x158] sm:$0xf]
    %v139 = vld [vmem:[#allocation5 + $0x15c] sm:$0xf]
    %v140 = vld [vmem:[#allocation5 + $0x160] sm:$0xf]
    %v141 = vld [vmem:[#allocation5 + $0x164] sm:$0xf]
    %v142 = vld [vmem:[#allocation5 + $0x168] sm:$0xf]
    %v143 = vld [vmem:[#allocation5 + $0x16c] sm:$0xf]
    %v144 = vld [vmem:[#allocation5 + $0x170] sm:$0xf]
    %v145 = vld [vmem:[#allocation5 + $0x174] sm:$0xf]
    %v146 = vld [vmem:[#allocation5 + $0x178] sm:$0xf]
    %v147 = vld [vmem:[#allocation5 + $0x17c] sm:$0xf]
    %v148 = vld [vmem:[#allocation5 + $0x180] sm:$0xf]
    %v149 = vld [vmem:[#allocation5 + $0x184] sm:$0xf]
    %v150 = vld [vmem:[#allocation5 + $0x188] sm:$0xf]
    %v151 = vld [vmem:[#allocation5 + $0x18c] sm:$0xf]
    %v152 = vld [vmem:[#allocation5 + $0x190] sm:$0xf]
    %v153 = vld [vmem:[#allocation5 + $0x194] sm:$0xf]
    %v154 = vld [vmem:[#allocation5 + $0x198] sm:$0xf]
    %v155 = vld [vmem:[#allocation5 + $0x19c] sm:$0xf]
    %v156 = vld [vmem:[#allocation5 + $0x1a0] sm:$0xf]
    %v157 = vld [vmem:[#allocation5 + $0x1a4] sm:$0xf]
    %v158 = vld [vmem:[#allocation5 + $0x1a8] sm:$0xf]
    %v159 = vld [vmem:[#allocation5 + $0x1ac] sm:$0xf]
    %v160 = vld [vmem:[#allocation5 + $0x1b0] sm:$0xf]
    %v161 = vld [vmem:[#allocation5 + $0x1b4] sm:$0xf]
    %v162 = vld [vmem:[#allocation5 + $0x1b8] sm:$0xf]
    %v163 = vld [vmem:[#allocation5 + $0x1bc] sm:$0xf]
    %v164 = vld [vmem:[#allocation5 + $0x1c0] sm:$0xf]
    %v165 = vld [vmem:[#allocation5 + $0x1c4] sm:$0xf]
    %v166 = vld [vmem:[#allocation5 + $0x1c8] sm:$0xf]
    %v167 = vld [vmem:[#allocation5 + $0x1cc] sm:$0xf]
    %v168 = vld [vmem:[#allocation5 + $0x1d0] sm:$0xf]
    %v169 = vld [vmem:[#allocation5 + $0x1d4] sm:$0xf]
    %v170 = vld [vmem:[#allocation5 + $0x1d8] sm:$0xf]
    %v171 = vld [vmem:[#allocation5 + $0x1dc] sm:$0xf]
    %v172 = vld [vmem:[#allocation5 + $0x1e0] sm:$0xf]
    %v173 = vld [vmem:[#allocation5 + $0x1e4] sm:$0xf]
    %v174 = vld [vmem:[#allocation5 + $0x1e8] sm:$0xf]
    %v175 = vld [vmem:[#allocation5 + $0x1ec] sm:$0xf]
    %v176 = vld [vmem:[#allocation5 + $0x1f0] sm:$0xf]
    %v177 = vld [vmem:[#allocation5 + $0x1f4] sm:$0xf]
    %v178 = vld [vmem:[#allocation5 + $0x1f8] sm:$0xf]
    %v179 = vld [vmem:[#allocation5 + $0x1fc] sm:$0xf]
    %v180 = vld [vmem:[%s2] sm:$0x1]
    %v182 = vperm.slane %v180, 0
    %v188 = vunpack.c.l.b16 %v48
    %v189 = vunpack.c.h.b16 %v48
    %v190 = vunpack.c.l.b16 %v49
    %v191 = vunpack.c.h.b16 %v49
    %v192 = vunpack.c.l.b16 %v50
    %v193 = vunpack.c.h.b16 %v50
    %v194 = vunpack.c.l.b16 %v51
    %v195 = vunpack.c.h.b16 %v51
    %v196 = vpack.c.b16 %v188, %v188
    %v197 = vpack.c.b16 %v189, %v189
    %v198 = vpack.c.b16 %v190, %v190
    %v199 = vpack.c.b16 %v191, %v191
    %v200 = vpack.c.b16 %v192, %v192
    %v201 = vpack.c.b16 %v193, %v193
    %v202 = vpack.c.b16 %v194, %v194
    %v203 = vpack.c.b16 %v195, %v195
    %v340 = vunpack.c.l.b16 %v52
    %v341 = vunpack.c.l.b16 %v53
    %v342 = vunpack.c.l.b16 %v54
    %v343 = vunpack.c.l.b16 %v55
    %v344 = vunpack.c.l.b16 %v56
    %v345 = vunpack.c.l.b16 %v57
    %v346 = vunpack.c.l.b16 %v58
    %v347 = vunpack.c.l.b16 %v59
    %v348 = vunpack.c.l.b16 %v60
    %v349 = vunpack.c.l.b16 %v61
    %v350 = vunpack.c.l.b16 %v62
    %v351 = vunpack.c.l.b16 %v63
    %v352 = vunpack.c.l.b16 %v64
    %v353 = vunpack.c.l.b16 %v65
    %v354 = vunpack.c.l.b16 %v66
    %v355 = vunpack.c.l.b16 %v67
    %v356 = vunpack.c.l.b16 %v68
    %v357 = vunpack.c.l.b16 %v69
    %v358 = vunpack.c.l.b16 %v70
    %v359 = vunpack.c.l.b16 %v71
    %v360 = vunpack.c.l.b16 %v72
    %v361 = vunpack.c.l.b16 %v73
    %v362 = vunpack.c.l.b16 %v74
    %v363 = vunpack.c.l.b16 %v75
    %v364 = vunpack.c.l.b16 %v76
    %v365 = vunpack.c.l.b16 %v77
    %v366 = vunpack.c.l.b16 %v78
    %v367 = vunpack.c.l.b16 %v79
    %v368 = vunpack.c.l.b16 %v80
    %v369 = vunpack.c.l.b16 %v81
    %v370 = vunpack.c.l.b16 %v82
    %v371 = vunpack.c.l.b16 %v83
    %v372 = vunpack.c.l.b16 %v84
    %v373 = vunpack.c.l.b16 %v85
    %v374 = vunpack.c.l.b16 %v86
    %v375 = vunpack.c.l.b16 %v87
    %v376 = vunpack.c.l.b16 %v88
    %v377 = vunpack.c.l.b16 %v89
    %v378 = vunpack.c.l.b16 %v90
    %v379 = vunpack.c.l.b16 %v91
    %v380 = vunpack.c.l.b16 %v92
    %v381 = vunpack.c.l.b16 %v93
    %v382 = vunpack.c.l.b16 %v94
    %v383 = vunpack.c.l.b16 %v95
    %v384 = vunpack.c.l.b16 %v96
    %v385 = vunpack.c.l.b16 %v97
    %v386 = vunpack.c.l.b16 %v98
    %v387 = vunpack.c.l.b16 %v99
    %v388 = vunpack.c.l.b16 %v100
    %v389 = vunpack.c.l.b16 %v101
    %v390 = vunpack.c.l.b16 %v102
    %v391 = vunpack.c.l.b16 %v103
    %v392 = vunpack.c.l.b16 %v104
    %v393 = vunpack.c.l.b16 %v105
    %v394 = vunpack.c.l.b16 %v106
    %v395 = vunpack.c.l.b16 %v107
    %v396 = vunpack.c.l.b16 %v108
    %v397 = vunpack.c.l.b16 %v109
    %v398 = vunpack.c.l.b16 %v110
    %v399 = vunpack.c.l.b16 %v111
    %v400 = vunpack.c.l.b16 %v112
    %v401 = vunpack.c.l.b16 %v113
    %v402 = vunpack.c.l.b16 %v114
    %v403 = vunpack.c.l.b16 %v115
    %v404 = vunpack.c.l.b16 %v116
    %v405 = vunpack.c.l.b16 %v117
    %v406 = vunpack.c.l.b16 %v118
    %v407 = vunpack.c.l.b16 %v119
    %v408 = vunpack.c.l.b16 %v120
    %v409 = vunpack.c.l.b16 %v121
    %v410 = vunpack.c.l.b16 %v122
    %v411 = vunpack.c.l.b16 %v123
    %v412 = vunpack.c.l.b16 %v124
    %v413 = vunpack.c.l.b16 %v125
    %v414 = vunpack.c.l.b16 %v126
    %v415 = vunpack.c.l.b16 %v127
    %v416 = vunpack.c.l.b16 %v128
    %v417 = vunpack.c.l.b16 %v129
    %v418 = vunpack.c.l.b16 %v130
    %v419 = vunpack.c.l.b16 %v131
    %v420 = vunpack.c.l.b16 %v132
    %v421 = vunpack.c.l.b16 %v133
    %v422 = vunpack.c.l.b16 %v134
    %v423 = vunpack.c.l.b16 %v135
    %v424 = vunpack.c.l.b16 %v136
    %v425 = vunpack.c.l.b16 %v137
    %v426 = vunpack.c.l.b16 %v138
    %v427 = vunpack.c.l.b16 %v139
    %v428 = vunpack.c.l.b16 %v140
    %v429 = vunpack.c.l.b16 %v141
    %v430 = vunpack.c.l.b16 %v142
    %v431 = vunpack.c.l.b16 %v143
    %v432 = vunpack.c.l.b16 %v144
    %v433 = vunpack.c.l.b16 %v145
    %v434 = vunpack.c.l.b16 %v146
    %v435 = vunpack.c.l.b16 %v147
    %v436 = vunpack.c.l.b16 %v148
    %v437 = vunpack.c.l.b16 %v149
    %v438 = vunpack.c.l.b16 %v150
    %v439 = vunpack.c.l.b16 %v151
    %v440 = vunpack.c.l.b16 %v152
    %v441 = vunpack.c.l.b16 %v153
    %v442 = vunpack.c.l.b16 %v154
    %v443 = vunpack.c.l.b16 %v155
    %v444 = vunpack.c.l.b16 %v156
    %v445 = vunpack.c.l.b16 %v157
    %v446 = vunpack.c.l.b16 %v158
    %v447 = vunpack.c.l.b16 %v159
    %v448 = vunpack.c.l.b16 %v160
    %v449 = vunpack.c.l.b16 %v161
    %v450 = vunpack.c.l.b16 %v162
    %v451 = vunpack.c.l.b16 %v163
    %v452 = vunpack.c.l.b16 %v164
    %v453 = vunpack.c.l.b16 %v165
    %v454 = vunpack.c.l.b16 %v166
    %v455 = vunpack.c.l.b16 %v167
    %v456 = vunpack.c.l.b16 %v168
    %v457 = vunpack.c.l.b16 %v169
    %v458 = vunpack.c.l.b16 %v170
    %v459 = vunpack.c.l.b16 %v171
    %v460 = vunpack.c.l.b16 %v172
    %v461 = vunpack.c.l.b16 %v173
    %v462 = vunpack.c.l.b16 %v174
    %v463 = vunpack.c.l.b16 %v175
    %v464 = vunpack.c.l.b16 %v176
    %v465 = vunpack.c.l.b16 %v177
    %v466 = vunpack.c.l.b16 %v178
    %v467 = vunpack.c.l.b16 %v179
    %v468 = vpack.c.b16 %v341, %v340
    %v469 = vpack.c.b16 %v343, %v342
    %v470 = vpack.c.b16 %v345, %v344
    %v471 = vpack.c.b16 %v347, %v346
    %v472 = vpack.c.b16 %v349, %v348
    %v473 = vpack.c.b16 %v351, %v350
    %v474 = vpack.c.b16 %v353, %v352
    %v475 = vpack.c.b16 %v355, %v354
    %v476 = vpack.c.b16 %v357, %v356
    %v477 = vpack.c.b16 %v359, %v358
    %v478 = vpack.c.b16 %v361, %v360
    %v479 = vpack.c.b16 %v363, %v362
    %v480 = vpack.c.b16 %v365, %v364
    %v481 = vpack.c.b16 %v367, %v366
    %v482 = vpack.c.b16 %v369, %v368
    %v483 = vpack.c.b16 %v371, %v370
    %v484 = vpack.c.b16 %v373, %v372
    %v485 = vpack.c.b16 %v375, %v374
    %v486 = vpack.c.b16 %v377, %v376
    %v487 = vpack.c.b16 %v379, %v378
    %v488 = vpack.c.b16 %v381, %v380
    %v489 = vpack.c.b16 %v383, %v382
    %v490 = vpack.c.b16 %v385, %v384
    %v491 = vpack.c.b16 %v387, %v386
    %v492 = vpack.c.b16 %v389, %v388
    %v493 = vpack.c.b16 %v391, %v390
    %v494 = vpack.c.b16 %v393, %v392
    %v495 = vpack.c.b16 %v395, %v394
    %v496 = vpack.c.b16 %v397, %v396
    %v497 = vpack.c.b16 %v399, %v398
    %v498 = vpack.c.b16 %v401, %v400
    %v499 = vpack.c.b16 %v403, %v402
    %v500 = vpack.c.b16 %v405, %v404
    %v501 = vpack.c.b16 %v407, %v406
    %v502 = vpack.c.b16 %v409, %v408
    %v503 = vpack.c.b16 %v411, %v410
    %v504 = vpack.c.b16 %v413, %v412
    %v505 = vpack.c.b16 %v415, %v414
    %v506 = vpack.c.b16 %v417, %v416
    %v507 = vpack.c.b16 %v419, %v418
    %v508 = vpack.c.b16 %v421, %v420
    %v509 = vpack.c.b16 %v423, %v422
    %v510 = vpack.c.b16 %v425, %v424
    %v511 = vpack.c.b16 %v427, %v426
    %v512 = vpack.c.b16 %v429, %v428
    %v513 = vpack.c.b16 %v431, %v430
    %v514 = vpack.c.b16 %v433, %v432
    %v515 = vpack.c.b16 %v435, %v434
    %v516 = vpack.c.b16 %v437, %v436
    %v517 = vpack.c.b16 %v439, %v438
    %v518 = vpack.c.b16 %v441, %v440
    %v519 = vpack.c.b16 %v443, %v442
    %v520 = vpack.c.b16 %v445, %v444
    %v521 = vpack.c.b16 %v447, %v446
    %v522 = vpack.c.b16 %v449, %v448
    %v523 = vpack.c.b16 %v451, %v450
    %v524 = vpack.c.b16 %v453, %v452
    %v525 = vpack.c.b16 %v455, %v454
    %v526 = vpack.c.b16 %v457, %v456
    %v527 = vpack.c.b16 %v459, %v458
    %v528 = vpack.c.b16 %v461, %v460
    %v529 = vpack.c.b16 %v463, %v462
    %v530 = vpack.c.b16 %v465, %v464
    %v531 = vpack.c.b16 %v467, %v466
    %596 = vmatpush.bf16.msra.mxu0 %v475
    %597 = vmatpush.bf16.msra.mxu0 %v474
    %598 = vmatpush.bf16.msra.mxu0 %v473
    %599 = vmatpush.bf16.msra.mxu0 %v472
    %600 = vmatpush.bf16.msra.mxu0 %v471
    %601 = vmatpush.bf16.msra.mxu0 %v470
    %602 = vmatpush.bf16.msra.mxu0 %v469
    %603 = vmatpush.bf16.msra.mxu0 %v468
    %604 = vmatmul.bf16.gmra.mxu0 %v196
    %v605 = vpop.f32.mrf.mxu0
    %v606 = vadd.f32 %v182, %v605
    %v607 = vpop.f32.mrf.mxu0
    %608 = vdwg.mxu0
    %609 = vmatpush.bf16.msra.mxu0 %v483
    %610 = vmatpush.bf16.msra.mxu0 %v482
    %611 = vmatpush.bf16.msra.mxu0 %v481
    %612 = vmatpush.bf16.msra.mxu0 %v480
    %613 = vmatpush.bf16.msra.mxu0 %v479
    %614 = vmatpush.bf16.msra.mxu0 %v478
    %615 = vmatpush.bf16.msra.mxu0 %v477
    %616 = vmatpush.bf16.msra.mxu0 %v476
    %617 = vmatmul.bf16.gmra.mxu0 %v197
    %v618 = vpop.f32.mrf.mxu0
    %v619 = vadd.f32 %v606, %v618
    %v620 = vpop.f32.mrf.mxu0
    %621 = vdwg.mxu0
    %622 = vmatpush.bf16.msra.mxu0 %v491
    %623 = vmatpush.bf16.msra.mxu0 %v490
    %624 = vmatpush.bf16.msra.mxu0 %v489
    %625 = vmatpush.bf16.msra.mxu0 %v488
    %626 = vmatpush.bf16.msra.mxu0 %v487
    %627 = vmatpush.bf16.msra.mxu0 %v486
    %628 = vmatpush.bf16.msra.mxu0 %v485
    %629 = vmatpush.bf16.msra.mxu0 %v484
    %630 = vmatmul.bf16.gmra.mxu0 %v198
    %v631 = vpop.f32.mrf.mxu0
    %v632 = vadd.f32 %v619, %v631
    %v633 = vpop.f32.mrf.mxu0
    %634 = vdwg.mxu0
    %635 = vmatpush.bf16.msra.mxu0 %v499
    %636 = vmatpush.bf16.msra.mxu0 %v498
    %637 = vmatpush.bf16.msra.mxu0 %v497
    %638 = vmatpush.bf16.msra.mxu0 %v496
    %639 = vmatpush.bf16.msra.mxu0 %v495
    %640 = vmatpush.bf16.msra.mxu0 %v494
    %641 = vmatpush.bf16.msra.mxu0 %v493
    %642 = vmatpush.bf16.msra.mxu0 %v492
    %643 = vmatmul.bf16.gmra.mxu0 %v199
    %v644 = vpop.f32.mrf.mxu0
    %v645 = vadd.f32 %v632, %v644
    %v646 = vpop.f32.mrf.mxu0
    %647 = vdwg.mxu0
    %648 = vmatpush.bf16.msra.mxu0 %v507
    %649 = vmatpush.bf16.msra.mxu0 %v506
    %650 = vmatpush.bf16.msra.mxu0 %v505
    %651 = vmatpush.bf16.msra.mxu0 %v504
    %652 = vmatpush.bf16.msra.mxu0 %v503
    %653 = vmatpush.bf16.msra.mxu0 %v502
    %654 = vmatpush.bf16.msra.mxu0 %v501
    %655 = vmatpush.bf16.msra.mxu0 %v500
    %656 = vmatmul.bf16.gmra.mxu0 %v200
    %v657 = vpop.f32.mrf.mxu0
    %v658 = vadd.f32 %v645, %v657
    %v659 = vpop.f32.mrf.mxu0
    %660 = vdwg.mxu0
    %661 = vmatpush.bf16.msra.mxu0 %v515
    %662 = vmatpush.bf16.msra.mxu0 %v514
    %663 = vmatpush.bf16.msra.mxu0 %v513
    %664 = vmatpush.bf16.msra.mxu0 %v512
    %665 = vmatpush.bf16.msra.mxu0 %v511
    %666 = vmatpush.bf16.msra.mxu0 %v510
    %667 = vmatpush.bf16.msra.mxu0 %v509
    %668 = vmatpush.bf16.msra.mxu0 %v508
    %669 = vmatmul.bf16.gmra.mxu0 %v201
    %v670 = vpop.f32.mrf.mxu0
    %v671 = vadd.f32 %v658, %v670
    %v672 = vpop.f32.mrf.mxu0
    %673 = vdwg.mxu0
    %674 = vmatpush.bf16.msra.mxu0 %v523
    %675 = vmatpush.bf16.msra.mxu0 %v522
    %676 = vmatpush.bf16.msra.mxu0 %v521
    %677 = vmatpush.bf16.msra.mxu0 %v520
    %678 = vmatpush.bf16.msra.mxu0 %v519
    %679 = vmatpush.bf16.msra.mxu0 %v518
    %680 = vmatpush.bf16.msra.mxu0 %v517
    %681 = vmatpush.bf16.msra.mxu0 %v516
    %682 = vmatmul.bf16.gmra.mxu0 %v202
    %v683 = vpop.f32.mrf.mxu0
    %v684 = vadd.f32 %v671, %v683
    %v685 = vpop.f32.mrf.mxu0
    %686 = vdwg.mxu0
    %687 = vmatpush.bf16.msra.mxu0 %v531
    %688 = vmatpush.bf16.msra.mxu0 %v530
    %689 = vmatpush.bf16.msra.mxu0 %v529
    %690 = vmatpush.bf16.msra.mxu0 %v528
    %691 = vmatpush.bf16.msra.mxu0 %v527
    %692 = vmatpush.bf16.msra.mxu0 %v526
    %693 = vmatpush.bf16.msra.mxu0 %v525
    %694 = vmatpush.bf16.msra.mxu0 %v524
    %695 = vmatmul.bf16.gmra.mxu0 %v203
    %v696 = vpop.f32.mrf.mxu0
    %v697 = vadd.f32 %v684, %v696
    %v698 = vpop.f32.mrf.mxu0
    %699 = vdwg.mxu0
    %700 = vst [vmem:[#allocation7] sm:$0xff] %v697
    %v701 = vlaneseq
    %v702 = vand.u32 %v701, 127
    %vm703 = vcmp.ge.s32.totalorder %v702, 1
    %vm704 = vcmp.lt.s32.totalorder %v702, 21
    %vm705 = vmand %vm703, %vm704
    %v706 = vsel %vm705, %v697, -inf
    %707 = vmax.xlane.f32.xlu0 %v706
    %v708 = vpop.xlane.xlu0 %707
    %v709 = vsub.f32 %v697, %v708
    %v710 = vmul.f32 %v709, 1.442695
    %v711 = vpow.pop %v710
    %v712 = vsel %vm705, %v711, 0.0
    %713 = vadd.xlane.f32.xlu0 %v712
    %v714 = vpop.xlane.xlu0 %713
    %v715 = vlog2.pop %v714
    %v716 = vmul.f32 %v715, 0.6931472
    %v717 = vsub.f32 %v709, %v716
    %v718 = vsel %vm705, %v717, 0.0
    %vm719 = vcmp.ge.s32.totalorder %v702, 21
    %vm720 = vcmp.lt.s32.totalorder %v702, 41
    %vm721 = vmand %vm719, %vm720
    %v722 = vsel %vm721, %v697, -inf
    %723 = vmax.xlane.f32.xlu0 %v722
    %v724 = vpop.xlane.xlu0 %723
    %v725 = vsub.f32 %v697, %v724
    %v726 = vmul.f32 %v725, 1.442695
    %v727 = vpow.pop %v726
    %v728 = vsel %vm721, %v727, 0.0
    %729 = vadd.xlane.f32.xlu0 %v728
    %v730 = vpop.xlane.xlu0 %729
    %v731 = vlog2.pop %v730
    %v732 = vmul.f32 %v731, 0.6931472
    %v733 = vsub.f32 %v725, %v732
    %v734 = vsel %vm721, %v733, %v718
    %vm735 = vcmp.ge.s32.totalorder %v702, 41
    %vm736 = vcmp.lt.s32.totalorder %v702, 61
    %vm737 = vmand %vm735, %vm736
    %v738 = vsel %vm737, %v697, -inf
    %739 = vmax.xlane.f32.xlu0 %v738
    %v740 = vpop.xlane.xlu0 %739
    %v741 = vsub.f32 %v697, %v740
    %v742 = vmul.f32 %v741, 1.442695
    %v743 = vpow.pop %v742
    %v744 = vsel %vm737, %v743, 0.0
    %745 = vadd.xlane.f32.xlu0 %v744
    %v746 = vpop.xlane.xlu0 %745
    %v747 = vlog2.pop %v746
    %v748 = vmul.f32 %v747, 0.6931472
    %v749 = vsub.f32 %v741, %v748
    %v750 = vsel %vm737, %v749, %v734
    %vm751 = vcmp.eq.s32.totalorder %v702, 0
    %v752 = vmul.f32 %v697, 0.5
    %v753 = vtanh.pop %v752
    %v754 = vadd.f32 %v753, 1.0
    %v755 = vmul.f32 %v754, 0.5
    %v756 = vsel %vm751, %v755, %v750
    %vm757 = vcmp.eq.s32.totalorder %v702, 61
    %v758 = vmul.f32 %v752, 1.442695
    %v759 = vpow.pop %v758
    %v760 = vsel %vm757, %v759, %v756
    %vm761 = vcmp.eq.s32.totalorder %v702, 62
    %v762 = vsel %vm761, %v697, %v760
    %763 = vst [vmem:[#allocation8] sm:$0xff] %v762
    // Predicated region
    $region22: #{tpu_custom_call.1} parent=1 // pred_check
      _
    $region23: #{tpu_custom_call.1} parent=1 // pred_check_branch
      %765 = sbr.rel (0) target = $region25
    $region24: #{tpu_custom_call.1} parent=1 // pred_region
      %767 = vsyncadd [#allocation4], 0
      %s769 = sshll.u32 [#allocation7], 4
      %s770 = int_to_ptr.vmem [resolvable:$true] %s769
      %s771 = sshll.u32 %s3, 4
      %s772 = int_to_ptr.hbm [resolvable:$true] %s771
      %774 = dma.vmem_to_hbm [thread:$0]  %s770, 128, %s772, [#allocation4]
    $region25: #{tpu_custom_call.1} parent=1 // pred_fallthru
      _
    // Predicated region
    $region26: #{tpu_custom_call.1} parent=1 // pred_check
      _
    $region27: #{tpu_custom_call.1} parent=1 // pred_check_branch
      %776 = sbr.rel (0) target = $region29
    $region28: #{tpu_custom_call.1} parent=1 // pred_region
      %778 = vsyncadd [#allocation9], 0
      %s780 = sshll.u32 [#allocation8], 4
      %s781 = int_to_ptr.vmem [resolvable:$true] %s780
      %s782 = sshll.u32 %s4, 4
      %s783 = int_to_ptr.hbm [resolvable:$true] %s782
      %785 = dma.vmem_to_hbm [thread:$0]  %s781, 128, %s783, [#allocation9]
    $region29: #{tpu_custom_call.1} parent=1 // pred_fallthru
      _
    // Predicated region
    $region30: #{tpu_custom_call.1} parent=1 // pred_check
      _
    $region31: #{tpu_custom_call.1} parent=1 // pred_check_branch
      %787 = sbr.rel (0) target = $region33
    $region32: #{tpu_custom_call.1} parent=1 // pred_region
      %789 = dma.done [#allocation4], 128
    $region33: #{tpu_custom_call.1} parent=1 // pred_fallthru
      _
    // Predicated region
    $region34: #{tpu_custom_call.1} parent=1 // pred_check
      _
    $region35: #{tpu_custom_call.1} parent=1 // pred_check_branch
      %791 = sbr.rel (0) target = $region37
    $region36: #{tpu_custom_call.1} parent=1 // pred_region
      %793 = dma.done [#allocation9], 128
    $region37: #{tpu_custom_call.1} parent=1 // pred_fallthru
      _
    %794 = vsyncpa [#allocation3], 1
    %795 = vsyncpa [#allocation6], 1
    %796 = vsyncpa [#allocation4], 1
    %797 = vsyncpa [#allocation9], 1

</llo_original>
